<compile_context>
chip_gen: v5e
topology: v5e:2x2
jax: 0.10.0
libtpu: 0.0.40
codegen_flags: <defaults>
</compile_context>

<pallas_src>
import math

import jax
import jax.numpy as jnp
from jax.experimental import pallas as pl
from jax.experimental.pallas import tpu as pltpu


def att_node_selector_kernel(task_ref, uav_ref, wqk_ref, gumbel_ref, attn_ref, idx_ref):
    # task_ref:   (TB, G, E)  raw task embeddings (upstream dtype)
    # uav_ref:    (TB, E)     raw uav embedding (node dim squeezed)
    # wqk_ref:    (E, E)      fused W_query @ W_key^T (f32, grid-invariant)
    # gumbel_ref: (TB, G)     Gumbel(0,1) noise for the without-replacement sample
    # attn_ref:   (TB, G)     softmax attention weights (output)
    # idx_ref:    (TB, K)     selected task indices (output)
    TB, G, E = task_ref.shape
    K = idx_ref.shape[1]
    norm = 1.0 / math.sqrt(E)

    task = task_ref[...].astype(jnp.float32)
    uav = uav_ref[...].astype(jnp.float32)

    # --- fused projection (single MXU matmul): r = uav @ (W_query @ W_key^T) -----------
    r = jnp.dot(uav, wqk_ref[...], preferred_element_type=jnp.float32)          # (TB, E)

    # --- compatibility: compat[b,g] = norm * <task[b,g,:], r[b,:]> (VPU + lane reduce) --
    compat = norm * jnp.sum(task * r[:, None, :], axis=-1)                       # (TB, G)

    # --- softmax over the G task nodes (lane axis) --------------------------------------
    m = jnp.max(compat, axis=-1, keepdims=True)
    e = jnp.exp(compat - m)
    attn_ref[...] = (e / jnp.sum(e, axis=-1, keepdims=True)).astype(attn_ref.dtype)

    # --- multinomial w/o replacement == Gumbel-top-K on the logits ----------------------
    # rank[b,i] = #{ j : pert[b,j] beats pert[b,i] }, lowest-index-first tie-break
    # (matches lax.top_k).  All index masks below are batch-independent.
    pert = compat + gumbel_ref[...].astype(jnp.float32)                          # (TB, G)
    pcol = pert[:, :, None]                      # (TB, G, 1) — the single XLU relayout
    prow = pert[:, None, :]                      # (TB, 1, G) — cheap broadcast
    gi = jax.lax.broadcasted_iota(jnp.int32, (G, G), 0)[None]                    # (1, G, G)
    gj = jax.lax.broadcasted_iota(jnp.int32, (G, G), 1)[None]                    # (1, G, G)
    beats = (prow > pcol) | ((prow == pcol) & (gj < gi))                         # (TB, G, G)
    rank = jnp.sum(beats.astype(jnp.int32), axis=-1)                             # (TB, G)

    # invert ranks -> sorted indices: idx[b,k] = i such that rank[b,i] == k
    kk = jax.lax.broadcasted_iota(jnp.int32, (K, G), 0)[None]                    # (1, K, G)
    ii = jax.lax.broadcasted_iota(jnp.int32, (K, G), 1)[None]                    # (1, K, G)
    hit = rank[:, None, :] == kk                                                 # (TB, K, G)
    idx_ref[...] = jnp.sum(jnp.where(hit, ii, 0), axis=-1).astype(idx_ref.dtype)


def _choose_batch_tile(B, G, E, K):
    """Largest batch tile whose per-block live set fits comfortably in scoped VMEM."""
    # f32 words live per batch row inside a block: task row, the (G,G) all-pairs compare
    # stage, the (K,G) rank-inversion stage, plus small vectors.
    bytes_per_row = 4 * (G * E + 3 * G * G + 2 * K * G + 4 * G + E + K)
    budget = 20 << 20   # keep the (double-buffered) block well inside v7x's 64 MiB VMEM
    tb = max(1, budget // max(bytes_per_row, 1))
    if tb >= B:
        return B                      # single block: no batch padding needed
    return max(8, (tb // 8) * 8)      # tiled second-minor dims must be multiples of 8


def att_node_selector(embed_task, embed_uav, w_query, w_key, graph_size, gumbel):
    """Pallas implementation of AttNodeSelector.forward."""
    B, G, E = embed_task.shape
    K = int(graph_size)
    assert K <= G, "graph_size (samples without replacement) must be <= number of tasks"
    f32 = jnp.float32

    # Fused projection weight; built once per parameter set and reused across calls.
    wqk = jnp.dot(w_query.astype(f32), w_key.astype(f32).T)                      # (E, E)

    task = embed_task                    # keep upstream dtype; kernel upcasts in vregs
    uav = embed_uav.reshape(B, E)        # free reshape, drop the singleton node dim
    gum = gumbel

    TB = _choose_batch_tile(B, G, E, K)
    nb = pl.cdiv(B, TB)
    B_pad = nb * TB
    if B_pad != B:
        task = jnp.pad(task, ((0, B_pad - B), (0, 0), (0, 0)))
        uav = jnp.pad(uav, ((0, B_pad - B), (0, 0)))
        gum = jnp.pad(gum, ((0, B_pad - B), (0, 0)))

    block_bytes = (TB * G * E * task.dtype.itemsize
                   + TB * E * uav.dtype.itemsize
                   + E * E * 4
                   + TB * G * gum.dtype.itemsize
                   + TB * (G + K) * 4
                   + 4 * TB * (G * E + 3 * G * G + 2 * K * G))
    vmem_limit = int(min(64 << 20, max(32 << 20, 4 * block_bytes)))

    cost = pl.CostEstimate(
        flops=2 * B * E * E + 3 * B * G * E + 10 * B * G * G + 4 * B * K * G,
        transcendentals=B * G,
        bytes_accessed=(task.size * task.dtype.itemsize
                        + uav.size * uav.dtype.itemsize
                        + E * E * 4
                        + gum.size * gum.dtype.itemsize
                        + B_pad * (G + K) * 4),
    )

    attn, idx = pl.pallas_call(
        att_node_selector_kernel,
        out_shape=(
            jax.ShapeDtypeStruct((B_pad, G), f32),
            jax.ShapeDtypeStruct((B_pad, K), jnp.int32),
        ),
        grid=(nb,),
        in_specs=[
            pl.BlockSpec((TB, G, E), lambda b: (b, 0, 0)),   # task embeddings
            pl.BlockSpec((TB, E), lambda b: (b, 0)),         # uav embedding
            pl.BlockSpec((E, E), lambda b: (0, 0)),          # fused W_qk (grid-invariant)
            pl.BlockSpec((TB, G), lambda b: (b, 0)),         # gumbel noise
        ],
        out_specs=(
            pl.BlockSpec((TB, G), lambda b: (b, 0)),         # attention weights
            pl.BlockSpec((TB, K), lambda b: (b, 0)),         # selected indices
        ),
        compiler_params=pltpu.CompilerParams(
            dimension_semantics=("parallel",),
            vmem_limit_bytes=vmem_limit,
        ),
        cost_estimate=cost,
    )(task, uav, wqk, gum)

    attn = attn[:B]
    idx = idx[:B]
    return attn[..., None], idx          # attn as (B, G, 1), matching the module


def reference(embed_task, embed_uav, w_query, w_key, graph_size, gumbel):
    """Pure-JAX reference mirroring the PyTorch forward (multinomial via Gumbel-top-k)."""
    B, G, E = embed_task.shape
    norm = 1.0 / math.sqrt(E)
    q = embed_uav.reshape(B, E).astype(jnp.float32) @ w_query                    # (B, E)
    k = (embed_task.reshape(B * G, E).astype(jnp.float32) @ w_key).reshape(B, G, E)
    compat = norm * jnp.einsum("be,bge->bg", q, k)                               # (B, G)
    attn = jax.nn.softmax(compat, axis=-1)
    _, idx = jax.lax.top_k(compat + gumbel, graph_size)                          # w/o replacement
    return attn[..., None], idx


if __name__ == "__main__":
    # small shapes consistent with the module: batch=2, graph nodes=8, embed=32
    B, G, E = 2, 8, 32
    graph_size = G   # sample graph_size of G tasks -> probability-weighted permutation

    key = jax.random.PRNGKey(0)
    k1, k2, k3, k4, k5 = jax.random.split(key, 5)

    embed_task = jax.random.normal(k1, (B, G, E), dtype=jnp.float32)
    embed_uav = jax.random.normal(k2, (B, 1, E), dtype=jnp.float32)

    # init_parameters(): uniform(-1/sqrt(last_dim), 1/sqrt(last_dim)) on (E, E) weights
    stdv = 1.0 / math.sqrt(E)
    w_query = jax.random.uniform(k3, (E, E), jnp.float32, -stdv, stdv)
    w_key = jax.random.uniform(k4, (E, E), jnp.float32, -stdv, stdv)

    # TODO(synk): torch.multinomial draws from torch's global RNG; here the equivalent
    #             Gumbel noise comes from a JAX key (same distribution, different stream).
    gumbel = jax.random.gumbel(k5, (B, G), dtype=jnp.float32)

    attn, idx = att_node_selector(embed_task, embed_uav, w_query, w_key, graph_size, gumbel)
    jax.block_until_ready((attn, idx))

    ref_attn, ref_idx = reference(embed_task, embed_uav, w_query, w_key, graph_size, gumbel)
    assert jnp.allclose(attn, ref_attn, rtol=1e-5, atol=1e-5), "attention weights mismatch"
    assert jnp.array_equal(idx, ref_idx), "selected indices mismatch"
    # sanity: each row is a valid without-replacement draw (distinct indices in [0, G))
    assert jnp.all((idx >= 0) & (idx < G))
    assert all(len(set(row)) == graph_size for row in jax.device_get(idx).tolist())

    print("KERNEL_OK")
</pallas_src>

<mosaic_0001>
module attributes {stable_mosaic.version = 11 : i64} {
  func.func @att_node_selector_kernel(%arg0: i32, %arg1: memref<2x8x32xf32, #tpu.memory_space<vmem>>, %arg2: memref<2x32xf32, #tpu.memory_space<vmem>>, %arg3: memref<32x32xf32, #tpu.memory_space<vmem>>, %arg4: memref<2x8xf32, #tpu.memory_space<vmem>>, %arg5: memref<2x8xf32, #tpu.memory_space<vmem>>, %arg6: memref<2x8xi32, #tpu.memory_space<vmem>>) attributes {dimension_semantics = [#tpu.dimension_semantics<parallel>], iteration_bounds = array<i64: 1>, scalar_prefetch = 0 : i64, scratch_operands = 0 : i64, tpu.core_type = #tpu.core_type<tc>, window_params = [{transform_indices = @transform_0, window_bounds = array<i64: 2, 8, 32>}, {transform_indices = @transform_1, window_bounds = array<i64: 2, 32>}, {pipeline_mode = #tpu.pipeline_mode<synchronous>, transform_indices = @transform_2, window_bounds = array<i64: 32, 32>}, {transform_indices = @transform_3, window_bounds = array<i64: 2, 8>}, {transform_indices = @transform_4, window_bounds = array<i64: 2, 8>}, {transform_indices = @transform_5, window_bounds = array<i64: 2, 8>}]} {
    %c0 = arith.constant 0 : index
    %c0_0 = arith.constant 0 : index
    %c0_1 = arith.constant 0 : index
    %0 = vector.load %arg1[%c0, %c0_0, %c0_1] : memref<2x8x32xf32, #tpu.memory_space<vmem>>, vector<2x8x32xf32>
    %c0_2 = arith.constant 0 : index
    %c0_3 = arith.constant 0 : index
    %1 = vector.load %arg2[%c0_2, %c0_3] : memref<2x32xf32, #tpu.memory_space<vmem>>, vector<2x32xf32>
    %c0_4 = arith.constant 0 : index
    %c0_5 = arith.constant 0 : index
    %2 = vector.load %arg3[%c0_4, %c0_5] : memref<32x32xf32, #tpu.memory_space<vmem>>, vector<32x32xf32>
    %cst = arith.constant dense<0.000000e+00> : vector<2x32xf32>
    %3 = tpu.matmul %1, %2, %cst {dimension_numbers = #tpu.dot_dimension_numbers<[1], [0], [0], [1], [0, 0, 1, 1], [], []>} : vector<2x32xf32>, vector<32x32xf32>, vector<2x32xf32> -> vector<2x32xf32>
    %4 = vector.shape_cast %3 : vector<2x32xf32> to vector<2x1x32xf32>
    %5 = vector.broadcast %4 : vector<2x1x32xf32> to vector<2x8x32xf32>
    %6 = arith.mulf %0, %5 : vector<2x8x32xf32>
    %cst_6 = arith.constant dense<0.000000e+00> : vector<2x8xf32>
    %7 = vector.multi_reduction <add>, %6, %cst_6 [2] : vector<2x8x32xf32> to vector<2x8xf32>
    %cst_7 = arith.constant 0.176776692 : f32
    %8 = vector.broadcast %cst_7 : f32 to vector<2x8xf32>
    %9 = arith.mulf %8, %7 : vector<2x8xf32>
    %cst_8 = arith.constant dense<0xFF800000> : vector<2xf32>
    %10 = vector.multi_reduction <maximumf>, %9, %cst_8 [1] : vector<2x8xf32> to vector<2xf32>
    %11 = vector.shape_cast %10 : vector<2xf32> to vector<2x1xf32>
    %12 = vector.broadcast %11 : vector<2x1xf32> to vector<2x8xf32>
    %13 = arith.subf %9, %12 : vector<2x8xf32>
    %14 = math.exp %13 : vector<2x8xf32>
    %cst_9 = arith.constant dense<0.000000e+00> : vector<2xf32>
    %15 = vector.multi_reduction <add>, %14, %cst_9 [1] : vector<2x8xf32> to vector<2xf32>
    %16 = vector.shape_cast %15 : vector<2xf32> to vector<2x1xf32>
    %17 = vector.broadcast %16 : vector<2x1xf32> to vector<2x8xf32>
    %18 = arith.divf %14, %17 : vector<2x8xf32>
    %c0_10 = arith.constant 0 : index
    %c0_11 = arith.constant 0 : index
    %19 = vector.load %arg5[%c0_10, %c0_11] : memref<2x8xf32, #tpu.memory_space<vmem>>, vector<2x8xf32>
    tpu.vector_store %arg5[%c0_10, %c0_11], %18 {strides = array<i32>} : memref<2x8xf32, #tpu.memory_space<vmem>>, vector<2x8xf32>,
    %c0_12 = arith.constant 0 : index
    %c0_13 = arith.constant 0 : index
    %20 = vector.load %arg4[%c0_12, %c0_13] : memref<2x8xf32, #tpu.memory_space<vmem>>, vector<2x8xf32>
    %21 = arith.addf %9, %20 : vector<2x8xf32>
    %22 = vector.shape_cast %21 : vector<2x8xf32> to vector<2x8x1xf32>
    %23 = vector.shape_cast %21 : vector<2x8xf32> to vector<2x1x8xf32>
    %24 = tpu.iota {dimensions = array<i32: 0>} : vector<8x8xi32>
    %25 = vector.shape_cast %24 : vector<8x8xi32> to vector<1x8x8xi32>
    %26 = tpu.iota {dimensions = array<i32: 1>} : vector<8x8xi32>
    %27 = vector.shape_cast %26 : vector<8x8xi32> to vector<1x8x8xi32>
    %28 = vector.broadcast %23 : vector<2x1x8xf32> to vector<2x8x8xf32>
    %29 = vector.broadcast %22 : vector<2x8x1xf32> to vector<2x8x8xf32>
    %30 = arith.cmpf ogt, %28, %29 : vector<2x8x8xf32>
    %31 = vector.broadcast %23 : vector<2x1x8xf32> to vector<2x8x8xf32>
    %32 = vector.broadcast %22 : vector<2x8x1xf32> to vector<2x8x8xf32>
    %33 = arith.cmpf oeq, %31, %32 : vector<2x8x8xf32>
    %34 = arith.cmpi slt, %27, %25 : vector<1x8x8xi32>
    %35 = vector.broadcast %34 : vector<1x8x8xi1> to vector<2x8x8xi1>
    %36 = arith.andi %33, %35 : vector<2x8x8xi1>
    %37 = arith.ori %30, %36 : vector<2x8x8xi1>
    %38 = arith.extui %37 : vector<2x8x8xi1> to vector<2x8x8xi32>
    %cst_14 = arith.constant dense<0> : vector<2x8xi32>
    %39 = vector.multi_reduction <add>, %38, %cst_14 [2] : vector<2x8x8xi32> to vector<2x8xi32>
    %40 = tpu.iota {dimensions = array<i32: 0>} : vector<8x8xi32>
    %41 = vector.shape_cast %40 : vector<8x8xi32> to vector<1x8x8xi32>
    %42 = tpu.iota {dimensions = array<i32: 1>} : vector<8x8xi32>
    %43 = vector.shape_cast %42 : vector<8x8xi32> to vector<1x8x8xi32>
    %44 = vector.shape_cast %39 : vector<2x8xi32> to vector<2x1x8xi32>
    %45 = vector.broadcast %44 : vector<2x1x8xi32> to vector<2x8x8xi32>
    %46 = vector.broadcast %41 : vector<1x8x8xi32> to vector<2x8x8xi32>
    %47 = arith.cmpi eq, %45, %46 : vector<2x8x8xi32>
    %c0_i32 = arith.constant 0 : i32
    %48 = vector.shape_cast %43 : vector<1x8x8xi32> to vector<1x8x8xi32>
    %49 = vector.broadcast %48 : vector<1x8x8xi32> to vector<2x8x8xi32>
    %50 = vector.broadcast %c0_i32 : i32 to vector<2x8x8xi32>
    %51 = arith.select %47, %49, %50 : vector<2x8x8xi1>, vector<2x8x8xi32>
    %cst_15 = arith.constant dense<0> : vector<2x8xi32>
    %52 = vector.multi_reduction <add>, %51, %cst_15 [2] : vector<2x8x8xi32> to vector<2x8xi32>
    %c0_16 = arith.constant 0 : index
    %c0_17 = arith.constant 0 : index
    %53 = vector.load %arg6[%c0_16, %c0_17] : memref<2x8xi32, #tpu.memory_space<vmem>>, vector<2x8xi32>
    tpu.vector_store %arg6[%c0_16, %c0_17], %52 {strides = array<i32>} : memref<2x8xi32, #tpu.memory_space<vmem>>, vector<2x8xi32>,
    return
  }
  func.func @transform_0(%arg0: i32) -> (i32, i32, i32) {
    %c0_i32 = arith.constant 0 : i32
    %c0_i32_0 = arith.constant 0 : i32
    %c0_i32_1 = arith.constant 0 : i32
    return %arg0, %c0_i32, %c0_i32_0 : i32, i32, i32
  }
  func.func @transform_1(%arg0: i32) -> (i32, i32) {
    %c0_i32 = arith.constant 0 : i32
    %c0_i32_0 = arith.constant 0 : i32
    return %arg0, %c0_i32 : i32, i32
  }
  func.func @transform_2(%arg0: i32) -> (i32, i32) {
    %c0_i32 = arith.constant 0 : i32
    %c0_i32_0 = arith.constant 0 : i32
    %c0_i32_1 = arith.constant 0 : i32
    return %c0_i32, %c0_i32_0 : i32, i32
  }
  func.func @transform_3(%arg0: i32) -> (i32, i32) {
    %c0_i32 = arith.constant 0 : i32
    %c0_i32_0 = arith.constant 0 : i32
    return %arg0, %c0_i32 : i32, i32
  }
  func.func @transform_4(%arg0: i32) -> (i32, i32) {
    %c0_i32 = arith.constant 0 : i32
    %c0_i32_0 = arith.constant 0 : i32
    return %arg0, %c0_i32 : i32, i32
  }
  func.func @transform_5(%arg0: i32) -> (i32, i32) {
    %c0_i32 = arith.constant 0 : i32
    %c0_i32_0 = arith.constant 0 : i32
    return %arg0, %c0_i32 : i32, i32
  }
}

</mosaic_0001>

<llo_original>
// kernel: tpu_custom_call.1
$region0: #{tpu_custom_call.1}
  #allocation0 [shape = 'u32[]', space=smem, size = 0x4, offset = 0x4, fixed_abs, tag = 'smem constant byte address 0x4 - core index']
  #allocation1 [shape = 'u32[72,128]{1,0:T(1,128)}', space=vmem, size = 0x9000, scoped, tag = 'internal scratch']
  %s0 = inlined_call_operand.hbm [shape: f32[2,8,32], index: 0, kind: input, shape index: {}]
  %s1 = inlined_call_operand.hbm [shape: f32[2,32], index: 1, kind: input, shape index: {}]
  %s2 = inlined_call_operand.hbm [shape: f32[32,32], index: 2, kind: input, shape index: {}]
  %s3 = inlined_call_operand.vmem [shape: f32[2,8], index: 3, kind: input, shape index: {}]
  %s4 = inlined_call_operand.hbm [shape: f32[2,8], index: 4, kind: output, shape index: {0}]
  %s5 = inlined_call_operand.hbm [shape: s32[2,8], index: 5, kind: output, shape index: {1}]
  %6 = xla_tuple %s4, %s5
  %s7 = sld [smem:[#allocation0]]
  $region46: #{tpu_custom_call.1} parent=0
    _
  %s9 = ssub.s32 1, %s7
  %s10 = scalar_select 0, %s9, %s7
  $region1: #{tpu_custom_call.1} parent=0
    #allocation2 [shape = 'u8[8192]{0}', space=vmem, size = 0x2000, scoped, tag = 'input window, operand 0, single buffered']
    #allocation3 [shape = 's32[1]{0}', space=sflag, size = 0x4, scoped, tag = 'scoped memory for tpu_custom_call.1']
    #allocation4 [shape = 's32[1]{0}', space=sflag, size = 0x4, scoped, tag = 'scoped memory for tpu_custom_call.1']
    #allocation5 [shape = 'u8[1024]{0}', space=vmem, size = 0x400, scoped, tag = 'input window, operand 1, single buffered']
    #allocation6 [shape = 's32[1]{0}', space=sflag, size = 0x4, scoped, tag = 'scoped memory for tpu_custom_call.1']
    #allocation7 [shape = 'u8[16384]{0}', space=vmem, size = 0x4000, scoped, tag = 'input window, operand 2, single buffered']
    #allocation8 [shape = 'u8[1024]{0}', space=vmem, size = 0x400, scoped, tag = 'output window, operand 0, single buffered']
    #allocation9 [shape = 'u8[1024]{0}', space=vmem, size = 0x400, scoped, tag = 'output window, operand 1, single buffered']
    #allocation10 [shape = 's32[1]{0}', space=sflag, size = 0x4, scoped, tag = 'scoped memory for tpu_custom_call.1']
    %11 = vsyncpa [#allocation3], 0
    %12 = vsyncpa [#allocation6], 0
    %13 = vsyncpa [#allocation4], 0
    %14 = vsyncpa [#allocation10], 0
    // Predicated region
    $region2: #{tpu_custom_call.1} parent=1 // pred_check
      _
    $region3: #{tpu_custom_call.1} parent=1 // pred_check_branch
      %16 = sbr.rel (0) target = $region5
    $region4: #{tpu_custom_call.1} parent=1 // pred_region
      %18 = vsyncadd [#allocation3], 0
      %s19 = sshll.u32 %s0, 4
      %s20 = int_to_ptr.hbm [resolvable:$true] %s19
      %s21 = sshll.u32 [#allocation2], 4
      %s22 = int_to_ptr.vmem [resolvable:$true] %s21
      %27 = dma.hbm_to_vmem [thread:$0]  %s20, 256, %s22, [#allocation3], 128, 128, 8
    $region5: #{tpu_custom_call.1} parent=1 // pred_fallthru
      _
    // Predicated region
    $region6: #{tpu_custom_call.1} parent=1 // pred_check
      _
    $region7: #{tpu_custom_call.1} parent=1 // pred_check_branch
      %29 = sbr.rel (0) target = $region9
    $region8: #{tpu_custom_call.1} parent=1 // pred_region
      %31 = vsyncadd [#allocation6], 0
      %s33 = sshll.u32 %s1, 4
      %s34 = int_to_ptr.hbm [resolvable:$true] %s33
      %s35 = sshll.u32 [#allocation5], 4
      %s36 = int_to_ptr.vmem [resolvable:$true] %s35
      %38 = dma.hbm_to_vmem [thread:$0]  %s34, 32, %s36, [#allocation6]
    $region9: #{tpu_custom_call.1} parent=1 // pred_fallthru
      _
    // Predicated region
    $region10: #{tpu_custom_call.1} parent=1 // pred_check
      _
    $region11: #{tpu_custom_call.1} parent=1 // pred_check_branch
      %40 = sbr.rel (0) target = $region13
    $region12: #{tpu_custom_call.1} parent=1 // pred_region
      %42 = vsyncadd [#allocation6], 0
      %s43 = sshll.u32 %s2, 4
      %s44 = int_to_ptr.hbm [resolvable:$true] %s43
      %s45 = sshll.u32 [#allocation7], 4
      %s46 = int_to_ptr.vmem [resolvable:$true] %s45
      %51 = dma.hbm_to_vmem [thread:$0]  %s44, 512, %s46, [#allocation6], 128, 128, 8
    $region13: #{tpu_custom_call.1} parent=1 // pred_fallthru
      _
    // Predicated region
    $region14: #{tpu_custom_call.1} parent=1 // pred_check
      _
    $region15: #{tpu_custom_call.1} parent=1 // pred_check_branch
      %53 = sbr.rel (0) target = $region17
    $region16: #{tpu_custom_call.1} parent=1 // pred_region
      _
    $region17: #{tpu_custom_call.1} parent=1 // pred_fallthru
      _
    // Predicated region
    $region18: #{tpu_custom_call.1} parent=1 // pred_check
      _
    $region19: #{tpu_custom_call.1} parent=1 // pred_check_branch
      %55 = sbr.rel (0) target = $region21
    $region20: #{tpu_custom_call.1} parent=1 // pred_region
      %57 = dma.done [#allocation3], 256
    $region21: #{tpu_custom_call.1} parent=1 // pred_fallthru
      _
    // Predicated region
    $region22: #{tpu_custom_call.1} parent=1 // pred_check
      _
    $region23: #{tpu_custom_call.1} parent=1 // pred_check_branch
      %59 = sbr.rel (0) target = $region25
    $region24: #{tpu_custom_call.1} parent=1 // pred_region
      %61 = dma.done [#allocation6], 32
    $region25: #{tpu_custom_call.1} parent=1 // pred_fallthru
      _
    // Predicated region
    $region26: #{tpu_custom_call.1} parent=1 // pred_check
      _
    $region27: #{tpu_custom_call.1} parent=1 // pred_check_branch
      %63 = sbr.rel (0) target = $region29
    $region28: #{tpu_custom_call.1} parent=1 // pred_region
      %65 = dma.done [#allocation6], 512
    $region29: #{tpu_custom_call.1} parent=1 // pred_fallthru
      _
    %v66 = vld [vmem:[#allocation2] sm:$0xff]
    %v67 = vld [vmem:[#allocation2 + $0x8] sm:$0xff]
    %v68 = vld [vmem:[#allocation5] sm:$0x3]
    %v69 = vld [vmem:[#allocation7] sm:$0xff]
    %v70 = vld [vmem:[#allocation7 + $0x8] sm:$0xff]
    %v71 = vld [vmem:[#allocation7 + $0x10] sm:$0xff]
    %v72 = vld [vmem:[#allocation7 + $0x18] sm:$0xff]
    %vm73 = vcmask 261120
    %v75 = vsel %vm73, %v68, 0
    %77 = vmatpush.msra.mxu0 0.0
    %78 = vmatpush.msra.mxu0 0.0
    %79 = vmatpush.msra.mxu0 0.0
    %80 = vmatpush.msra.mxu0 0.0
    %81 = vmatpush.msra.mxu0 0.0
    %82 = vmatpush.msra.mxu0 0.0
    %83 = vmatpush.msra.mxu0 0.0
    %84 = vmatpush.msra.mxu0 0.0
    %85 = vmatpush.msra.mxu0 0.0
    %86 = vmatpush.msra.mxu0 0.0
    %87 = vmatpush.msra.mxu0 0.0
    %88 = vmatpush.msra.mxu0 0.0
    %89 = vmatpush.msra.mxu0 %v72
    %90 = vmatpush.msra.mxu0 %v71
    %91 = vmatpush.msra.mxu0 %v70
    %92 = vmatpush.msra.mxu0 %v69
    %93 = vmatmul.f32.gmra.mxu0 %v75
    %v94 = vpop.f32.mrf.mxu0
    %v95 = vadd.f32 0.0, %v94
    %96 = vdwg.mxu0
    %v98 = vrot.slane %v95, 1
    %v99 = vperm.slane %v95, 0
    %v100 = vperm.slane %v98, 0
    %v103 = vmul.f32 %v66, %v99
    %v104 = vmul.f32 %v67, %v100
    %v105 = vsel %vm73, %v103, 0.0
    %106 = vadd.xlane.f32.xlu0 %v105
    %v107 = vpop.xlane.xlu0 %106
    %v108 = vsel %vm73, %v104, 0.0
    %109 = vadd.xlane.f32.xlu0 %v108
    %v110 = vpop.xlane.xlu0 %109
    %v111 = vmul.f32 %v107, 0.17677669
    %v112 = vmul.f32 %v110, 0.17677669
    %v115 = vlaneseq
    %v116 = vand.u32 %v115, 127
    %v117 = vperm.slane %v111, %v116
    %v118 = vperm.slane %v112, %v116
    %vm119 = vcmask 1041409
    %v120 = vsel %vm119, %v118, %v117
    %vm122 = vcmask 58368
    %v123 = vsel %vm122, %v120, -inf
    %124 = vmax.xlane.f32.xlu0 %v123
    %v125 = vpop.xlane.xlu0 %124
    %v127 = vperm.slane %v125, 0
    %v128 = vperm.slane %v125, 1
    %v131 = vsub.f32 %v111, %v127
    %v132 = vsub.f32 %v112, %v128
    %v133 = vmul.f32 %v131, 1.442695
    %v134 = vpow.pop %v133
    %v135 = vmul.f32 %v132, 1.442695
    %v136 = vpow.pop %v135
    %139 = vset.pattern.permute.xlu0 0
    %140 = vperm.xlu0 %139, %v134
    %v141 = vpop.permute.xlu0 %140
    %142 = vset.pattern.permute.xlu0 0
    %143 = vperm.xlu0 %142, %v136
    %v144 = vpop.permute.xlu0 %143
    %v145 = vperm.slane %v141, %v116
    %v146 = vperm.slane %v144, %v116
    %v147 = vsel %vm119, %v146, %v145
    %v149 = vsel %vm122, %v147, 0.0
    %150 = vadd.xlane.f32.xlu0 %v149
    %v151 = vpop.xlane.xlu0 %150
    %v153 = vperm.slane %v151, 0
    %v154 = vperm.slane %v151, 1
    %v157 = vrcp.pop %v153
    %v158 = vmul.f32 %v153, %v157
    %v159 = vsub.f32 1.0, %v158
    %v160 = vmul.f32 %v157, %v159
    %v161 = vadd.f32 %v157, %v160
    %vm162 = vweird.f32 %v153
    %vm163 = vweird.f32 %v157
    %vm164 = vmor %vm162, %vm163
    %v165 = vsel %vm164, %v157, %v161
    %v166 = vand.u32 2147483647, %v153
    %vm167 = vcmp.eq.f32.partialorder %v166, 8.507059e+37
    %v168 = vand.u32 %v153, 2147483648
    %v169 = vor.u32 1.1754944e-38, %v168
    %v170 = vsel %vm167, %v169, %v165
    %v171 = vmul.f32 %v134, %v170
    %v172 = vrcp.pop %v154
    %v173 = vmul.f32 %v154, %v172
    %v174 = vsub.f32 1.0, %v173
    %v175 = vmul.f32 %v172, %v174
    %v176 = vadd.f32 %v172, %v175
    %vm177 = vweird.f32 %v154
    %vm178 = vweird.f32 %v172
    %vm179 = vmor %vm177, %vm178
    %v180 = vsel %vm179, %v172, %v176
    %v181 = vand.u32 2147483647, %v154
    %vm182 = vcmp.eq.f32.partialorder %v181, 8.507059e+37
    %v183 = vand.u32 %v154, 2147483648
    %v184 = vor.u32 1.1754944e-38, %v183
    %v185 = vsel %vm182, %v184, %v180
    %v186 = vmul.f32 %v136, %v185
    %189 = vset.pattern.permute.xlu0 0
    %190 = vperm.xlu0 %189, %v171
    %v191 = vpop.permute.xlu0 %190
    %192 = vset.pattern.permute.xlu0 0
    %193 = vperm.xlu0 %192, %v186
    %v194 = vpop.permute.xlu0 %193
    %v195 = vperm.slane %v191, %v116
    %v196 = vperm.slane %v194, %v116
    %v197 = vsel %vm119, %v196, %v195
    %199 = vst.msk [vmem:[#allocation8] sm:$0x3] %vm122, %v197
    %v200 = vld [vmem:[%s3] sm:$0x3]
    %v202 = vperm.slane %v200, 0
    %v203 = vlaneseq
    %v204 = vshrl.u32 %v203, 7
    %206 = vset.pattern.permute.xlu0 %v204
    %207 = vperm.xlu0 %206, %v202
    %v208 = vpop.permute.xlu0 %207
    %v209 = vperm.slane %v200, 1
    %v210 = vlaneseq
    %v211 = vshrl.u32 %v210, 7
    %213 = vset.pattern.permute.xlu0 %v211
    %214 = vperm.xlu0 %213, %v209
    %v215 = vpop.permute.xlu0 %214
    %v218 = vadd.f32 %v111, %v208
    %v219 = vadd.f32 %v112, %v215
    %v220 = vlaneseq
    %v221 = vshrl.u32 %v220, 7
    %223 = vset.pattern.permute.xlu0 0
    %224 = vperm.xlu0 %223, %v218
    %v225 = vpop.permute.xlu0 %224
    %227 = vset.pattern.permute.xlu0 0
    %228 = vperm.xlu0 %227, %v219
    %v229 = vpop.permute.xlu0 %228
    %v230 = vperm.slane %v225, 0
    %v231 = vperm.slane %v225, 1
    %v232 = vperm.slane %v225, 2
    %v233 = vperm.slane %v225, 3
    %v234 = vperm.slane %v225, 4
    %v235 = vperm.slane %v225, 5
    %v236 = vperm.slane %v225, 6
    %v237 = vperm.slane %v225, 7
    %v238 = vperm.slane %v229, 0
    %v239 = vperm.slane %v229, 1
    %v240 = vperm.slane %v229, 2
    %v241 = vperm.slane %v229, 3
    %v242 = vperm.slane %v229, 4
    %v243 = vperm.slane %v229, 5
    %v244 = vperm.slane %v229, 6
    %v245 = vperm.slane %v229, 7
    %vm262 = vcmp.gt.f32.partialorder %v218, %v230
    %vm263 = vcmp.gt.f32.partialorder %v218, %v231
    %vm264 = vcmp.gt.f32.partialorder %v218, %v232
    %vm265 = vcmp.gt.f32.partialorder %v218, %v233
    %vm266 = vcmp.gt.f32.partialorder %v218, %v234
    %vm267 = vcmp.gt.f32.partialorder %v218, %v235
    %vm268 = vcmp.gt.f32.partialorder %v218, %v236
    %vm269 = vcmp.gt.f32.partialorder %v218, %v237
    %vm270 = vcmp.gt.f32.partialorder %v219, %v238
    %vm271 = vcmp.gt.f32.partialorder %v219, %v239
    %vm272 = vcmp.gt.f32.partialorder %v219, %v240
    %vm273 = vcmp.gt.f32.partialorder %v219, %v241
    %vm274 = vcmp.gt.f32.partialorder %v219, %v242
    %vm275 = vcmp.gt.f32.partialorder %v219, %v243
    %vm276 = vcmp.gt.f32.partialorder %v219, %v244
    %vm277 = vcmp.gt.f32.partialorder %v219, %v245
    %vm278 = vcmp.eq.f32.partialorder %v218, %v230
    %vm279 = vcmp.eq.f32.partialorder %v218, %v231
    %vm280 = vcmp.eq.f32.partialorder %v218, %v232
    %vm281 = vcmp.eq.f32.partialorder %v218, %v233
    %vm282 = vcmp.eq.f32.partialorder %v218, %v234
    %vm283 = vcmp.eq.f32.partialorder %v218, %v235
    %vm284 = vcmp.eq.f32.partialorder %v218, %v236
    %vm285 = vcmp.eq.f32.partialorder %v218, %v237
    %vm286 = vcmp.eq.f32.partialorder %v219, %v238
    %vm287 = vcmp.eq.f32.partialorder %v219, %v239
    %vm288 = vcmp.eq.f32.partialorder %v219, %v240
    %vm289 = vcmp.eq.f32.partialorder %v219, %v241
    %vm290 = vcmp.eq.f32.partialorder %v219, %v242
    %vm291 = vcmp.eq.f32.partialorder %v219, %v243
    %vm292 = vcmp.eq.f32.partialorder %v219, %v244
    %vm293 = vcmp.eq.f32.partialorder %v219, %v245
    %vm294 = vcmp.lt.s32.totalorder %v116, %v221
    %v295 = vsel %vm294, 1, 0
    %vm296 = vcmp.eq.s32.totalorder %v295, 1
    %v297 = vsel %vm296, 1, 0
    %v298 = vperm.slane %v297, 0
    %v299 = vlaneseq
    %v300 = vshrl.u32 %v299, 7
    %302 = vset.pattern.permute.xlu0 %v300
    %303 = vperm.xlu0 %302, %v298
    %v304 = vpop.permute.xlu0 %303
    %v305 = vperm.slane %v297, 1
    %v306 = vlaneseq
    %v307 = vshrl.u32 %v306, 7
    %309 = vset.pattern.permute.xlu0 %v307
    %310 = vperm.xlu0 %309, %v305
    %v311 = vpop.permute.xlu0 %310
    %v312 = vperm.slane %v297, 2
    %v313 = vlaneseq
    %v314 = vshrl.u32 %v313, 7
    %316 = vset.pattern.permute.xlu0 %v314
    %317 = vperm.xlu0 %316, %v312
    %v318 = vpop.permute.xlu0 %317
    %v319 = vperm.slane %v297, 3
    %v320 = vlaneseq
    %v321 = vshrl.u32 %v320, 7
    %323 = vset.pattern.permute.xlu0 %v321
    %324 = vperm.xlu0 %323, %v319
    %v325 = vpop.permute.xlu0 %324
    %v326 = vperm.slane %v297, 4
    %v327 = vlaneseq
    %v328 = vshrl.u32 %v327, 7
    %330 = vset.pattern.permute.xlu0 %v328
    %331 = vperm.xlu0 %330, %v326
    %v332 = vpop.permute.xlu0 %331
    %v333 = vperm.slane %v297, 5
    %v334 = vlaneseq
    %v335 = vshrl.u32 %v334, 7
    %337 = vset.pattern.permute.xlu0 %v335
    %338 = vperm.xlu0 %337, %v333
    %v339 = vpop.permute.xlu0 %338
    %v340 = vperm.slane %v297, 6
    %v341 = vlaneseq
    %v342 = vshrl.u32 %v341, 7
    %344 = vset.pattern.permute.xlu0 %v342
    %345 = vperm.xlu0 %344, %v340
    %v346 = vpop.permute.xlu0 %345
    %v347 = vperm.slane %v297, 7
    %v348 = vlaneseq
    %v349 = vshrl.u32 %v348, 7
    %351 = vset.pattern.permute.xlu0 %v349
    %352 = vperm.xlu0 %351, %v347
    %v353 = vpop.permute.xlu0 %352
    %vm354 = vcmp.ne.s32.totalorder %v304, 0
    %vm355 = vcmp.ne.s32.totalorder %v311, 0
    %vm356 = vcmp.ne.s32.totalorder %v318, 0
    %vm357 = vcmp.ne.s32.totalorder %v325, 0
    %vm358 = vcmp.ne.s32.totalorder %v332, 0
    %vm359 = vcmp.ne.s32.totalorder %v339, 0
    %vm360 = vcmp.ne.s32.totalorder %v346, 0
    %vm361 = vcmp.ne.s32.totalorder %v353, 0
    %vm362 = vmand %vm278, %vm354
    %vm363 = vmand %vm279, %vm355
    %vm364 = vmand %vm280, %vm356
    %vm365 = vmand %vm281, %vm357
    %vm366 = vmand %vm282, %vm358
    %vm367 = vmand %vm283, %vm359
    %vm368 = vmand %vm284, %vm360
    %vm369 = vmand %vm285, %vm361
    %vm370 = vmand %vm286, %vm354
    %vm371 = vmand %vm287, %vm355
    %vm372 = vmand %vm288, %vm356
    %vm373 = vmand %vm289, %vm357
    %vm374 = vmand %vm290, %vm358
    %vm375 = vmand %vm291, %vm359
    %vm376 = vmand %vm292, %vm360
    %vm377 = vmand %vm293, %vm361
    %vm378 = vmor %vm262, %vm362
    %vm379 = vmor %vm263, %vm363
    %vm380 = vmor %vm264, %vm364
    %vm381 = vmor %vm265, %vm365
    %vm382 = vmor %vm266, %vm366
    %vm383 = vmor %vm267, %vm367
    %vm384 = vmor %vm268, %vm368
    %vm385 = vmor %vm269, %vm369
    %vm386 = vmor %vm270, %vm370
    %vm387 = vmor %vm271, %vm371
    %vm388 = vmor %vm272, %vm372
    %vm389 = vmor %vm273, %vm373
    %vm390 = vmor %vm274, %vm374
    %vm391 = vmor %vm275, %vm375
    %vm392 = vmor %vm276, %vm376
    %vm393 = vmor %vm277, %vm377
    %v394 = vsel %vm378, 1, 0
    %v395 = vsel %vm379, 1, 0
    %v396 = vsel %vm380, 1, 0
    %v397 = vsel %vm381, 1, 0
    %v398 = vsel %vm382, 1, 0
    %v399 = vsel %vm383, 1, 0
    %v400 = vsel %vm384, 1, 0
    %v401 = vsel %vm385, 1, 0
    %v402 = vsel %vm386, 1, 0
    %v403 = vsel %vm387, 1, 0
    %v404 = vsel %vm388, 1, 0
    %v405 = vsel %vm389, 1, 0
    %v406 = vsel %vm390, 1, 0
    %v407 = vsel %vm391, 1, 0
    %v408 = vsel %vm392, 1, 0
    %v409 = vsel %vm393, 1, 0
    %410 = vset.pattern.permute.xlu0 0
    %411 = vperm.xlu0 %410, %v394
    %v412 = vpop.permute.xlu0 %411
    %413 = vset.pattern.permute.xlu0 0
    %414 = vperm.xlu0 %413, %v395
    %v415 = vpop.permute.xlu0 %414
    %416 = vset.pattern.permute.xlu0 0
    %417 = vperm.xlu0 %416, %v396
    %v418 = vpop.permute.xlu0 %417
    %419 = vset.pattern.permute.xlu0 0
    %420 = vperm.xlu0 %419, %v397
    %v421 = vpop.permute.xlu0 %420
    %422 = vset.pattern.permute.xlu0 0
    %423 = vperm.xlu0 %422, %v398
    %v424 = vpop.permute.xlu0 %423
    %425 = vset.pattern.permute.xlu0 0
    %426 = vperm.xlu0 %425, %v399
    %v427 = vpop.permute.xlu0 %426
    %428 = vset.pattern.permute.xlu0 0
    %429 = vperm.xlu0 %428, %v400
    %v430 = vpop.permute.xlu0 %429
    %431 = vset.pattern.permute.xlu0 0
    %432 = vperm.xlu0 %431, %v401
    %v433 = vpop.permute.xlu0 %432
    %434 = vset.pattern.permute.xlu0 0
    %435 = vperm.xlu0 %434, %v402
    %v436 = vpop.permute.xlu0 %435
    %437 = vset.pattern.permute.xlu0 0
    %438 = vperm.xlu0 %437, %v403
    %v439 = vpop.permute.xlu0 %438
    %440 = vset.pattern.permute.xlu0 0
    %441 = vperm.xlu0 %440, %v404
    %v442 = vpop.permute.xlu0 %441
    %443 = vset.pattern.permute.xlu0 0
    %444 = vperm.xlu0 %443, %v405
    %v445 = vpop.permute.xlu0 %444
    %446 = vset.pattern.permute.xlu0 0
    %447 = vperm.xlu0 %446, %v406
    %v448 = vpop.permute.xlu0 %447
    %449 = vset.pattern.permute.xlu0 0
    %450 = vperm.xlu0 %449, %v407
    %v451 = vpop.permute.xlu0 %450
    %452 = vset.pattern.permute.xlu0 0
    %453 = vperm.xlu0 %452, %v408
    %v454 = vpop.permute.xlu0 %453
    %455 = vset.pattern.permute.xlu0 0
    %456 = vperm.xlu0 %455, %v409
    %v457 = vpop.permute.xlu0 %456
    %v458 = vperm.slane %v412, %v116
    %v459 = vperm.slane %v415, %v116
    %v460 = vperm.slane %v418, %v116
    %v461 = vperm.slane %v421, %v116
    %v462 = vperm.slane %v424, %v116
    %v463 = vperm.slane %v427, %v116
    %v464 = vperm.slane %v430, %v116
    %v465 = vperm.slane %v433, %v116
    %v466 = vperm.slane %v436, %v116
    %v467 = vperm.slane %v439, %v116
    %v468 = vperm.slane %v442, %v116
    %v469 = vperm.slane %v445, %v116
    %v470 = vperm.slane %v448, %v116
    %v471 = vperm.slane %v451, %v116
    %v472 = vperm.slane %v454, %v116
    %v473 = vperm.slane %v457, %v116
    %v474 = vsel %vm119, %v459, %v458
    %vm475 = vcmask 1042434
    %v476 = vsel %vm475, %v460, %v474
    %vm477 = vcmask 1043459
    %v478 = vsel %vm477, %v461, %v476
    %vm479 = vcmask 1044484
    %v480 = vsel %vm479, %v462, %v478
    %vm481 = vcmask 1045509
    %v482 = vsel %vm481, %v463, %v480
    %vm483 = vcmask 1046534
    %v484 = vsel %vm483, %v464, %v482
    %vm485 = vcmask 1047559
    %v486 = vsel %vm485, %v465, %v484
    %v487 = vsel %vm119, %v467, %v466
    %v488 = vsel %vm475, %v468, %v487
    %v489 = vsel %vm477, %v469, %v488
    %v490 = vsel %vm479, %v470, %v489
    %v491 = vsel %vm481, %v471, %v490
    %v492 = vsel %vm483, %v472, %v491
    %v493 = vsel %vm485, %v473, %v492
    %vm494 = vcmask 64512
    %v495 = vsel %vm494, %v486, 0
    %v496 = vand.u32 %v495, 65535
    %v497 = vshrl.u32 %v495, 16
    %v498 = vcvt.s32.f32 %v496
    %v499 = vcvt.s32.f32 %v497
    %500 = vadd.xlane.f32.xlu0 %v498
    %v501 = vpop.xlane.xlu0 %500
    %502 = vadd.xlane.f32.xlu0 %v499
    %v503 = vpop.xlane.xlu0 %502
    %v504 = vcvt.f32.s32 %v501
    %v505 = vcvt.f32.s32 %v503
    %v506 = vshll.u32 %v505, 16
    %v507 = vadd.s32 %v506, %v504
    %v508 = vsel %vm494, %v493, 0
    %v509 = vand.u32 %v508, 65535
    %v510 = vshrl.u32 %v508, 16
    %v511 = vcvt.s32.f32 %v509
    %v512 = vcvt.s32.f32 %v510
    %513 = vadd.xlane.f32.xlu0 %v511
    %v514 = vpop.xlane.xlu0 %513
    %515 = vadd.xlane.f32.xlu0 %v512
    %v516 = vpop.xlane.xlu0 %515
    %v517 = vcvt.f32.s32 %v514
    %v518 = vcvt.f32.s32 %v516
    %v519 = vshll.u32 %v518, 16
    %v520 = vadd.s32 %v519, %v517
    %v521 = vperm.slane %v221, 0
    %v522 = vperm.slane %v221, 1
    %v523 = vperm.slane %v221, 2
    %v524 = vperm.slane %v221, 3
    %v525 = vperm.slane %v221, 4
    %v526 = vperm.slane %v221, 5
    %v527 = vperm.slane %v221, 6
    %v528 = vperm.slane %v221, 7
    %vm529 = vcmp.eq.s32.totalorder %v507, %v521
    %vm530 = vcmp.eq.s32.totalorder %v507, %v522
    %vm531 = vcmp.eq.s32.totalorder %v507, %v523
    %vm532 = vcmp.eq.s32.totalorder %v507, %v524
    %vm533 = vcmp.eq.s32.totalorder %v507, %v525
    %vm534 = vcmp.eq.s32.totalorder %v507, %v526
    %vm535 = vcmp.eq.s32.totalorder %v507, %v527
    %vm536 = vcmp.eq.s32.totalorder %v507, %v528
    %vm537 = vcmp.eq.s32.totalorder %v520, %v521
    %vm538 = vcmp.eq.s32.totalorder %v520, %v522
    %vm539 = vcmp.eq.s32.totalorder %v520, %v523
    %vm540 = vcmp.eq.s32.totalorder %v520, %v524
    %vm541 = vcmp.eq.s32.totalorder %v520, %v525
    %vm542 = vcmp.eq.s32.totalorder %v520, %v526
    %vm543 = vcmp.eq.s32.totalorder %v520, %v527
    %vm544 = vcmp.eq.s32.totalorder %v520, %v528
    %v545 = vlaneseq
    %v546 = vshrl.u32 %v545, 7
    %548 = vset.pattern.permute.xlu0 %v546
    %549 = vperm.xlu0 %548, %v116
    %v550 = vpop.permute.xlu0 %549
    %v551 = vsel %vm529, %v550, 0
    %v552 = vsel %vm530, %v550, 0
    %v553 = vsel %vm531, %v550, 0
    %v554 = vsel %vm532, %v550, 0
    %v555 = vsel %vm533, %v550, 0
    %v556 = vsel %vm534, %v550, 0
    %v557 = vsel %vm535, %v550, 0
    %v558 = vsel %vm536, %v550, 0
    %v559 = vsel %vm537, %v550, 0
    %v560 = vsel %vm538, %v550, 0
    %v561 = vsel %vm539, %v550, 0
    %v562 = vsel %vm540, %v550, 0
    %v563 = vsel %vm541, %v550, 0
    %v564 = vsel %vm542, %v550, 0
    %v565 = vsel %vm543, %v550, 0
    %v566 = vsel %vm544, %v550, 0
    %567 = vset.pattern.permute.xlu0 0
    %568 = vperm.xlu0 %567, %v551
    %v569 = vpop.permute.xlu0 %568
    %570 = vset.pattern.permute.xlu0 0
    %571 = vperm.xlu0 %570, %v552
    %v572 = vpop.permute.xlu0 %571
    %573 = vset.pattern.permute.xlu0 0
    %574 = vperm.xlu0 %573, %v553
    %v575 = vpop.permute.xlu0 %574
    %576 = vset.pattern.permute.xlu0 0
    %577 = vperm.xlu0 %576, %v554
    %v578 = vpop.permute.xlu0 %577
    %579 = vset.pattern.permute.xlu0 0
    %580 = vperm.xlu0 %579, %v555
    %v581 = vpop.permute.xlu0 %580
    %582 = vset.pattern.permute.xlu0 0
    %583 = vperm.xlu0 %582, %v556
    %v584 = vpop.permute.xlu0 %583
    %585 = vset.pattern.permute.xlu0 0
    %586 = vperm.xlu0 %585, %v557
    %v587 = vpop.permute.xlu0 %586
    %588 = vset.pattern.permute.xlu0 0
    %589 = vperm.xlu0 %588, %v558
    %v590 = vpop.permute.xlu0 %589
    %591 = vset.pattern.permute.xlu0 0
    %592 = vperm.xlu0 %591, %v559
    %v593 = vpop.permute.xlu0 %592
    %594 = vset.pattern.permute.xlu0 0
    %595 = vperm.xlu0 %594, %v560
    %v596 = vpop.permute.xlu0 %595
    %597 = vset.pattern.permute.xlu0 0
    %598 = vperm.xlu0 %597, %v561
    %v599 = vpop.permute.xlu0 %598
    %600 = vset.pattern.permute.xlu0 0
    %601 = vperm.xlu0 %600, %v562
    %v602 = vpop.permute.xlu0 %601
    %603 = vset.pattern.permute.xlu0 0
    %604 = vperm.xlu0 %603, %v563
    %v605 = vpop.permute.xlu0 %604
    %606 = vset.pattern.permute.xlu0 0
    %607 = vperm.xlu0 %606, %v564
    %v608 = vpop.permute.xlu0 %607
    %609 = vset.pattern.permute.xlu0 0
    %610 = vperm.xlu0 %609, %v565
    %v611 = vpop.permute.xlu0 %610
    %612 = vset.pattern.permute.xlu0 0
    %613 = vperm.xlu0 %612, %v566
    %v614 = vpop.permute.xlu0 %613
    %v615 = vperm.slane %v569, %v116
    %v616 = vperm.slane %v572, %v116
    %v617 = vperm.slane %v575, %v116
    %v618 = vperm.slane %v578, %v116
    %v619 = vperm.slane %v581, %v116
    %v620 = vperm.slane %v584, %v116
    %v621 = vperm.slane %v587, %v116
    %v622 = vperm.slane %v590, %v116
    %v623 = vperm.slane %v593, %v116
    %v624 = vperm.slane %v596, %v116
    %v625 = vperm.slane %v599, %v116
    %v626 = vperm.slane %v602, %v116
    %v627 = vperm.slane %v605, %v116
    %v628 = vperm.slane %v608, %v116
    %v629 = vperm.slane %v611, %v116
    %v630 = vperm.slane %v614, %v116
    %v631 = vsel %vm119, %v616, %v615
    %v632 = vsel %vm475, %v617, %v631
    %v633 = vsel %vm477, %v618, %v632
    %v634 = vsel %vm479, %v619, %v633
    %v635 = vsel %vm481, %v620, %v634
    %v636 = vsel %vm483, %v621, %v635
    %v637 = vsel %vm485, %v622, %v636
    %v638 = vsel %vm119, %v624, %v623
    %v639 = vsel %vm475, %v625, %v638
    %v640 = vsel %vm477, %v626, %v639
    %v641 = vsel %vm479, %v627, %v640
    %v642 = vsel %vm481, %v628, %v641
    %v643 = vsel %vm483, %v629, %v642
    %v644 = vsel %vm485, %v630, %v643
    %v645 = vsel %vm494, %v637, 0
    %v646 = vand.u32 %v645, 65535
    %v647 = vshrl.u32 %v645, 16
    %v648 = vcvt.s32.f32 %v646
    %v649 = vcvt.s32.f32 %v647
    %650 = vadd.xlane.f32.xlu0 %v648
    %v651 = vpop.xlane.xlu0 %650
    %652 = vadd.xlane.f32.xlu0 %v649
    %v653 = vpop.xlane.xlu0 %652
    %v654 = vcvt.f32.s32 %v651
    %v655 = vcvt.f32.s32 %v653
    %v656 = vshll.u32 %v655, 16
    %v657 = vadd.s32 %v656, %v654
    %v658 = vsel %vm494, %v644, 0
    %v659 = vand.u32 %v658, 65535
    %v660 = vshrl.u32 %v658, 16
    %v661 = vcvt.s32.f32 %v659
    %v662 = vcvt.s32.f32 %v660
    %663 = vadd.xlane.f32.xlu0 %v661
    %v664 = vpop.xlane.xlu0 %663
    %665 = vadd.xlane.f32.xlu0 %v662
    %v666 = vpop.xlane.xlu0 %665
    %v667 = vcvt.f32.s32 %v664
    %v668 = vcvt.f32.s32 %v666
    %v669 = vshll.u32 %v668, 16
    %v670 = vadd.s32 %v669, %v667
    %v671 = vperm.slane %v657, %v116
    %v672 = vperm.slane %v670, %v116
    %v673 = vsel %vm119, %v672, %v671
    %674 = vst.msk [vmem:[#allocation9] sm:$0x3] %vm122, %v673
    // Predicated region
    $region30: #{tpu_custom_call.1} parent=1 // pred_check
      _
    $region31: #{tpu_custom_call.1} parent=1 // pred_check_branch
      %676 = sbr.rel (0) target = $region33
    $region32: #{tpu_custom_call.1} parent=1 // pred_region
      %678 = vsyncadd [#allocation4], 0
      %s680 = sshll.u32 [#allocation8], 4
      %s681 = int_to_ptr.vmem [resolvable:$true] %s680
      %s682 = sshll.u32 %s4, 4
      %s683 = int_to_ptr.hbm [resolvable:$true] %s682
      %685 = dma.vmem_to_hbm [thread:$0]  %s681, 32, %s683, [#allocation4]
    $region33: #{tpu_custom_call.1} parent=1 // pred_fallthru
      _
    // Predicated region
    $region34: #{tpu_custom_call.1} parent=1 // pred_check
      _
    $region35: #{tpu_custom_call.1} parent=1 // pred_check_branch
      %687 = sbr.rel (0) target = $region37
    $region36: #{tpu_custom_call.1} parent=1 // pred_region
      %689 = vsyncadd [#allocation10], 0
      %s691 = sshll.u32 [#allocation9], 4
      %s692 = int_to_ptr.vmem [resolvable:$true] %s691
      %s693 = sshll.u32 %s5, 4
      %s694 = int_to_ptr.hbm [resolvable:$true] %s693
      %696 = dma.vmem_to_hbm [thread:$0]  %s692, 32, %s694, [#allocation10]
    $region37: #{tpu_custom_call.1} parent=1 // pred_fallthru
      _
    // Predicated region
    $region38: #{tpu_custom_call.1} parent=1 // pred_check
      _
    $region39: #{tpu_custom_call.1} parent=1 // pred_check_branch
      %698 = sbr.rel (0) target = $region41
    $region40: #{tpu_custom_call.1} parent=1 // pred_region
      %700 = dma.done [#allocation4], 32
    $region41: #{tpu_custom_call.1} parent=1 // pred_fallthru
      _
    // Predicated region
    $region42: #{tpu_custom_call.1} parent=1 // pred_check
      _
    $region43: #{tpu_custom_call.1} parent=1 // pred_check_branch
      %702 = sbr.rel (0) target = $region45
    $region44: #{tpu_custom_call.1} parent=1 // pred_region
      %704 = dma.done [#allocation10], 32
    $region45: #{tpu_custom_call.1} parent=1 // pred_fallthru
      _
    %705 = vsyncpa [#allocation3], 1
    %706 = vsyncpa [#allocation6], 1
    %707 = vsyncpa [#allocation4], 1
    %708 = vsyncpa [#allocation10], 1

</llo_original>
